<compile_context>
chip_gen: v7x
topology: tpu7x:2x2x1
jax: 0.10.0
libtpu: 0.0.40
codegen_flags: <defaults>
</compile_context>

<pallas_src>
import functools

import jax
import jax.numpy as jnp
from jax import lax
from jax.experimental import pallas as pl
from jax.experimental.pallas import tpu as pltpu

LEAKY_SLOPE = 0.01  # PyTorch nn.LeakyReLU default


def asc_kernel(x_ref, y_ref, w1x_ref, w1y_ref, b1_ref, w2_ref, b2_ref,
               m_rowp_ref, m_rown_ref, m_colp_ref, m_coln_ref, out_ref,
               *, W, HW, matmul_dtype):
    # x_ref / y_ref / out_ref : (NB, C, HW) VMEM tiles (NB batch elements)
    # w1x_ref, w1y_ref : (C, C)      split 1x1 conv weights (x-half, y-half)
    # w2_ref           : (3, C, 3C)  3x3 middle-depth taps grouped by column
    #                                shift dx; last axis is (ky, c_in)
    # b1_ref, b2_ref   : (C, 1) f32
    # m_*_ref          : (1, HW) f32 0/1 boundary masks (precomputed)
    NB = x_ref.shape[0]
    md = matmul_dtype

    # Constants: read once per grid step, reused across the NB elements.
    w1x = w1x_ref[...]
    w1y = w1y_ref[...]
    b1 = b1_ref[...]
    b2 = b2_ref[...]
    m_rowp = m_rowp_ref[...]      # 1.0 where row r-1 exists
    m_rown = m_rown_ref[...]      # 1.0 where row r+1 exists
    m_colp = m_colp_ref[...]      # 1.0 where col c-1 exists
    m_coln = m_coln_ref[...]      # 1.0 where col c+1 exists

    for nb in range(NB):          # NB is small & static -> full unroll
        x2 = x_ref[nb]            # (C, HW) f32
        y2 = y_ref[nb]

        # ---- 1x1x1 Conv3d on cat([x, y], channel): two K=C dots, no concat -
        t = (jnp.dot(w1x, x2.astype(md), preferred_element_type=jnp.float32)
             + jnp.dot(w1y, y2.astype(md), preferred_element_type=jnp.float32)
             + b1)
        t = jnp.where(t > 0, t, LEAKY_SLOPE * t)          # LeakyReLU (f32)

        # ---- 3x3 SAME conv (depth collapses), 3-row-group form -------------
        # Row-shifted copies (dy = -1, +1) with row-boundary masks.
        t_up = pltpu.roll(t, W, axis=1) * m_rowp          # t[c, r-1, :]
        t_dn = pltpu.roll(t, HW - W, axis=1) * m_rown     # t[c, r+1, :]
        s = jnp.concatenate([t_up, t, t_dn], axis=0)      # (3C, HW), ky-major

        # Column shifts of the whole stack (dx = -1, +1) with col masks.
        s_left = pltpu.roll(s, 1, axis=1) * m_colp        # s[:, c-1]
        s_right = pltpu.roll(s, HW - 1, axis=1) * m_coln  # s[:, c+1]

        h = (jnp.dot(w2_ref[0], s_left.astype(md),
                     preferred_element_type=jnp.float32)
             + jnp.dot(w2_ref[1], s.astype(md),
                       preferred_element_type=jnp.float32)
             + jnp.dot(w2_ref[2], s_right.astype(md),
                       preferred_element_type=jnp.float32)
             + b2)
        w = jax.nn.sigmoid(h)                             # (C, HW) f32

        # ---- gated blend: (1 - w) * x + w * y == x + w * (y - x) -----------
        out_ref[nb] = x2 + w * (y2 - x2)


def _batch_group(N, HW, target_lanes=2048):
    """How many batch elements to fold into one grid step."""
    nb = max(1, min(N, target_lanes // max(HW, 1)))
    while N % nb:
        nb -= 1
    return nb


def asc_forward(x_nchw, y_nchw, params, matmul_dtype=jnp.float32):
    """Runs ASC.forward. Inputs/outputs are NCHW (PyTorch convention).

    matmul_dtype: dtype of the MXU operands (use jnp.bfloat16 on v6e/v7x for
    the 918/996 TF/s rate; elementwise math and accumulation stay float32).
    """
    W1_3d, b1, W2_3d, b2 = params
    N, C, H, W = x_nchw.shape
    HW = H * W
    NB = _batch_group(N, HW)

    # ---- parameter prep (tiny, wrapper/XLA side) ----------------------------
    w1 = W1_3d.reshape(C, 2 * C)
    w1x = w1[:, :C].astype(matmul_dtype)                     # acts on x
    w1y = w1[:, C:].astype(matmul_dtype)                     # acts on y
    W2_mid = W2_3d[:, :, 1]                                  # (C, C, 3, 3)
    # (kx, c_out, ky*C + c_in): one (C, 3C) weight per column shift dx.
    w2_cols = jnp.transpose(W2_mid, (3, 0, 2, 1)).reshape(3, C, 3 * C)
    w2_cols = w2_cols.astype(matmul_dtype)
    b1r = b1.reshape(C, 1).astype(jnp.float32)
    b2r = b2.reshape(C, 1).astype(jnp.float32)

    # ---- boundary masks precomputed once (no per-step iota / div / mod) -----
    pos = jnp.arange(HW, dtype=jnp.int32)
    ri = pos // W
    ci = pos % W
    m_rowp = (ri >= 1).astype(jnp.float32).reshape(1, HW)
    m_rown = (ri <= H - 2).astype(jnp.float32).reshape(1, HW)
    m_colp = (ci >= 1).astype(jnp.float32).reshape(1, HW)
    m_coln = (ci <= W - 2).astype(jnp.float32).reshape(1, HW)

    # Free (metadata-only) reshapes: NCHW -> (N, C, H*W); no HBM transposes.
    x = x_nchw.reshape(N, C, HW).astype(jnp.float32)
    y = y_nchw.reshape(N, C, HW).astype(jnp.float32)

    img_spec = pl.BlockSpec((NB, C, HW), lambda g: (g, 0, 0))
    c2 = lambda g: (0, 0)
    c3 = lambda g: (0, 0, 0)

    kernel = functools.partial(asc_kernel, W=W, HW=HW,
                               matmul_dtype=matmul_dtype)

    cost = pl.CostEstimate(
        flops=2 * N * HW * C * (2 * C + 9 * C),      # 1x1 (K=2C) + 3x3 (K=9C)
        transcendentals=N * C * HW,                  # sigmoid
        bytes_accessed=3 * N * C * HW * 4)           # x, y, out

    out = pl.pallas_call(
        kernel,
        out_shape=jax.ShapeDtypeStruct((N, C, HW), jnp.float32),
        grid_spec=pltpu.PrefetchScalarGridSpec(
            num_scalar_prefetch=0,
            grid=(N // NB,),
            in_specs=[
                img_spec,                                   # x
                img_spec,                                   # y
                pl.BlockSpec((C, C), c2),                   # w1x
                pl.BlockSpec((C, C), c2),                   # w1y
                pl.BlockSpec((C, 1), c2),                   # b1
                pl.BlockSpec((3, C, 3 * C), c3),            # w2 column groups
                pl.BlockSpec((C, 1), c2),                   # b2
                pl.BlockSpec((1, HW), c2),                  # mask row-prev
                pl.BlockSpec((1, HW), c2),                  # mask row-next
                pl.BlockSpec((1, HW), c2),                  # mask col-prev
                pl.BlockSpec((1, HW), c2),                  # mask col-next
            ],
            out_specs=img_spec,
        ),
        compiler_params=pltpu.CompilerParams(
            dimension_semantics=("parallel",)),
        cost_estimate=cost,
    )(x, y, w1x, w1y, b1r, w2_cols, b2r, m_rowp, m_rown, m_colp, m_coln)

    return out.reshape(N, C, H, W)


def asc_reference(x_nchw, y_nchw, params):
    """Pure-JAX reference (uses lax.conv) for verification."""
    W1_3d, b1, W2_3d, b2 = params
    C = x_nchw.shape[1]
    W1m = W1_3d.reshape(C, 2 * C)
    xy = jnp.concatenate([x_nchw, y_nchw], axis=1)            # (N, 2C, H, W)
    t = jnp.einsum("nchw,oc->nohw", xy, W1m) + b1[None, :, None, None]
    t = jnp.where(t > 0, t, LEAKY_SLOPE * t)
    W2_mid = W2_3d[:, :, 1]                                   # (C, C, 3, 3)
    h = lax.conv_general_dilated(
        t, W2_mid, window_strides=(1, 1), padding="SAME",
        dimension_numbers=("NCHW", "OIHW", "NCHW")) + b2[None, :, None, None]
    w = jax.nn.sigmoid(h)
    return (1.0 - w) * x_nchw + w * y_nchw


if __name__ == "__main__":
    N, C, H, W = 2, 8, 16, 16

    key = jax.random.PRNGKey(0)
    kx, ky, k1, k2, k3, k4 = jax.random.split(key, 6)

    x = jax.random.normal(kx, (N, C, H, W), dtype=jnp.float32)
    y = jax.random.normal(ky, (N, C, H, W), dtype=jnp.float32)

    # Synthetic parameters with the same shapes as the nn.Conv3d modules.
    W1 = jax.random.normal(k1, (C, 2 * C, 1, 1, 1), dtype=jnp.float32) * 0.2
    b1 = jax.random.normal(k2, (C,), dtype=jnp.float32) * 0.1
    W2 = jax.random.normal(k3, (C, C, 3, 3, 3), dtype=jnp.float32) * 0.1
    b2 = jax.random.normal(k4, (C,), dtype=jnp.float32) * 0.1
    params = (W1, b1, W2, b2)

    ref = asc_reference(x, y, params)

    # Full-precision path (matches the PyTorch module's numerics).
    out = jax.block_until_ready(asc_forward(x, y, params))
    assert out.shape == (N, C, H, W)
    assert jnp.allclose(out, ref, atol=1e-3, rtol=1e-3), (
        f"f32 max abs err = {jnp.max(jnp.abs(out - ref))}")

    # bf16 MXU-operand path (recommended on v6e/v7x); elementwise stays f32.
    out_bf16 = jax.block_until_ready(
        asc_forward(x, y, params, matmul_dtype=jnp.bfloat16))
    assert jnp.allclose(out_bf16, ref, atol=5e-2, rtol=5e-2), (
        f"bf16 max abs err = {jnp.max(jnp.abs(out_bf16 - ref))}")

    print("KERNEL_OK")
</pallas_src>

<mosaic_0001>
module attributes {stable_mosaic.version = 11 : i64} {
  func.func @asc_kernel(%arg0: i32, %arg1: memref<2x8x256xf32, #tpu.memory_space<vmem>>, %arg2: memref<2x8x256xf32, #tpu.memory_space<vmem>>, %arg3: memref<8x8xf32, #tpu.memory_space<vmem>>, %arg4: memref<8x8xf32, #tpu.memory_space<vmem>>, %arg5: memref<8x1xf32, #tpu.memory_space<vmem>>, %arg6: memref<3x8x24xf32, #tpu.memory_space<vmem>>, %arg7: memref<8x1xf32, #tpu.memory_space<vmem>>, %arg8: memref<1x256xf32, #tpu.memory_space<vmem>>, %arg9: memref<1x256xf32, #tpu.memory_space<vmem>>, %arg10: memref<1x256xf32, #tpu.memory_space<vmem>>, %arg11: memref<1x256xf32, #tpu.memory_space<vmem>>, %arg12: memref<2x8x256xf32, #tpu.memory_space<vmem>>) attributes {dimension_semantics = [#tpu.dimension_semantics<parallel>], iteration_bounds = array<i64: 1>, scalar_prefetch = 0 : i64, scratch_operands = 0 : i64, tpu.core_type = #tpu.core_type<tc>, window_params = [{transform_indices = @transform_0, window_bounds = array<i64: 2, 8, 256>}, {transform_indices = @transform_1, window_bounds = array<i64: 2, 8, 256>}, {pipeline_mode = #tpu.pipeline_mode<synchronous>, transform_indices = @transform_2, window_bounds = array<i64: 8, 8>}, {pipeline_mode = #tpu.pipeline_mode<synchronous>, transform_indices = @transform_3, window_bounds = array<i64: 8, 8>}, {pipeline_mode = #tpu.pipeline_mode<synchronous>, transform_indices = @transform_4, window_bounds = array<i64: 8, 1>}, {pipeline_mode = #tpu.pipeline_mode<synchronous>, transform_indices = @transform_5, window_bounds = array<i64: 3, 8, 24>}, {pipeline_mode = #tpu.pipeline_mode<synchronous>, transform_indices = @transform_6, window_bounds = array<i64: 8, 1>}, {pipeline_mode = #tpu.pipeline_mode<synchronous>, transform_indices = @transform_7, window_bounds = array<i64: 1, 256>}, {pipeline_mode = #tpu.pipeline_mode<synchronous>, transform_indices = @transform_8, window_bounds = array<i64: 1, 256>}, {pipeline_mode = #tpu.pipeline_mode<synchronous>, transform_indices = @transform_9, window_bounds = array<i64: 1, 256>}, {pipeline_mode = #tpu.pipeline_mode<synchronous>, transform_indices = @transform_10, window_bounds = array<i64: 1, 256>}, {transform_indices = @transform_11, window_bounds = array<i64: 2, 8, 256>}]} {
    %c0 = arith.constant 0 : index
    %c0_0 = arith.constant 0 : index
    %0 = vector.load %arg3[%c0, %c0_0] : memref<8x8xf32, #tpu.memory_space<vmem>>, vector<8x8xf32>
    %c0_1 = arith.constant 0 : index
    %c0_2 = arith.constant 0 : index
    %1 = vector.load %arg4[%c0_1, %c0_2] : memref<8x8xf32, #tpu.memory_space<vmem>>, vector<8x8xf32>
    %c0_3 = arith.constant 0 : index
    %c0_4 = arith.constant 0 : index
    %2 = vector.load %arg5[%c0_3, %c0_4] : memref<8x1xf32, #tpu.memory_space<vmem>>, vector<8x1xf32>
    %c0_5 = arith.constant 0 : index
    %c0_6 = arith.constant 0 : index
    %3 = vector.load %arg7[%c0_5, %c0_6] : memref<8x1xf32, #tpu.memory_space<vmem>>, vector<8x1xf32>
    %c0_7 = arith.constant 0 : index
    %c0_8 = arith.constant 0 : index
    %4 = vector.load %arg8[%c0_7, %c0_8] : memref<1x256xf32, #tpu.memory_space<vmem>>, vector<1x256xf32>
    %c0_9 = arith.constant 0 : index
    %c0_10 = arith.constant 0 : index
    %5 = vector.load %arg9[%c0_9, %c0_10] : memref<1x256xf32, #tpu.memory_space<vmem>>, vector<1x256xf32>
    %c0_11 = arith.constant 0 : index
    %c0_12 = arith.constant 0 : index
    %6 = vector.load %arg10[%c0_11, %c0_12] : memref<1x256xf32, #tpu.memory_space<vmem>>, vector<1x256xf32>
    %c0_13 = arith.constant 0 : index
    %c0_14 = arith.constant 0 : index
    %7 = vector.load %arg11[%c0_13, %c0_14] : memref<1x256xf32, #tpu.memory_space<vmem>>, vector<1x256xf32>
    %c0_15 = arith.constant 0 : index
    %c0_16 = arith.constant 0 : index
    %c0_17 = arith.constant 0 : index
    %8 = vector.load %arg1[%c0_15, %c0_16, %c0_17] : memref<2x8x256xf32, #tpu.memory_space<vmem>>, vector<1x8x256xf32>
    %9 = vector.shape_cast %8 : vector<1x8x256xf32> to vector<8x256xf32>
    %c0_18 = arith.constant 0 : index
    %c0_19 = arith.constant 0 : index
    %c0_20 = arith.constant 0 : index
    %10 = vector.load %arg2[%c0_18, %c0_19, %c0_20] : memref<2x8x256xf32, #tpu.memory_space<vmem>>, vector<1x8x256xf32>
    %11 = vector.shape_cast %10 : vector<1x8x256xf32> to vector<8x256xf32>
    %cst = arith.constant dense<0.000000e+00> : vector<8x256xf32>
    %12 = tpu.matmul %0, %9, %cst {dimension_numbers = #tpu.dot_dimension_numbers<[1], [0], [0], [1], [0, 0, 1, 1], [], []>} : vector<8x8xf32>, vector<8x256xf32>, vector<8x256xf32> -> vector<8x256xf32>
    %cst_21 = arith.constant dense<0.000000e+00> : vector<8x256xf32>
    %13 = tpu.matmul %1, %11, %cst_21 {dimension_numbers = #tpu.dot_dimension_numbers<[1], [0], [0], [1], [0, 0, 1, 1], [], []>} : vector<8x8xf32>, vector<8x256xf32>, vector<8x256xf32> -> vector<8x256xf32>
    %14 = arith.addf %12, %13 : vector<8x256xf32>
    %15 = vector.broadcast %2 : vector<8x1xf32> to vector<8x256xf32>
    %16 = arith.addf %14, %15 : vector<8x256xf32>
    %cst_22 = arith.constant 0.000000e+00 : f32
    %17 = vector.broadcast %cst_22 : f32 to vector<8x256xf32>
    %18 = arith.cmpf ogt, %16, %17 : vector<8x256xf32>
    %cst_23 = arith.constant 0.00999999977 : f32
    %19 = vector.broadcast %cst_23 : f32 to vector<8x256xf32>
    %20 = arith.mulf %19, %16 : vector<8x256xf32>
    %21 = arith.select %18, %16, %20 : vector<8x256xi1>, vector<8x256xf32>
    %c16_i32 = arith.constant 16 : i32
    %22 = tpu.dynamic_rotate %21 by %c16_i32 dim 1 : vector<8x256xf32>, i32 -> vector<8x256xf32>
    %23 = vector.broadcast %4 : vector<1x256xf32> to vector<8x256xf32>
    %24 = arith.mulf %22, %23 : vector<8x256xf32>
    %c240_i32 = arith.constant 240 : i32
    %25 = tpu.dynamic_rotate %21 by %c240_i32 dim 1 : vector<8x256xf32>, i32 -> vector<8x256xf32>
    %26 = vector.broadcast %5 : vector<1x256xf32> to vector<8x256xf32>
    %27 = arith.mulf %25, %26 : vector<8x256xf32>
    %28 = tpu.concatenate %24, %21, %27 in 0 : vector<8x256xf32>, vector<8x256xf32>, vector<8x256xf32> -> vector<24x256xf32>
    %c1_i32 = arith.constant 1 : i32
    %29 = tpu.dynamic_rotate %28 by %c1_i32 dim 1 : vector<24x256xf32>, i32 -> vector<24x256xf32>
    %30 = vector.broadcast %6 : vector<1x256xf32> to vector<24x256xf32>
    %31 = arith.mulf %29, %30 : vector<24x256xf32>
    %c255_i32 = arith.constant 255 : i32
    %32 = tpu.dynamic_rotate %28 by %c255_i32 dim 1 : vector<24x256xf32>, i32 -> vector<24x256xf32>
    %33 = vector.broadcast %7 : vector<1x256xf32> to vector<24x256xf32>
    %34 = arith.mulf %32, %33 : vector<24x256xf32>
    %c0_24 = arith.constant 0 : index
    %c0_25 = arith.constant 0 : index
    %c0_26 = arith.constant 0 : index
    %35 = vector.load %arg6[%c0_24, %c0_25, %c0_26] : memref<3x8x24xf32, #tpu.memory_space<vmem>>, vector<1x8x24xf32>
    %36 = vector.shape_cast %35 : vector<1x8x24xf32> to vector<8x24xf32>
    %cst_27 = arith.constant dense<0.000000e+00> : vector<8x256xf32>
    %37 = tpu.matmul %36, %31, %cst_27 {dimension_numbers = #tpu.dot_dimension_numbers<[1], [0], [0], [1], [0, 0, 1, 1], [], []>} : vector<8x24xf32>, vector<24x256xf32>, vector<8x256xf32> -> vector<8x256xf32>
    %c1 = arith.constant 1 : index
    %c0_28 = arith.constant 0 : index
    %c0_29 = arith.constant 0 : index
    %38 = vector.load %arg6[%c1, %c0_28, %c0_29] : memref<3x8x24xf32, #tpu.memory_space<vmem>>, vector<1x8x24xf32>
    %39 = vector.shape_cast %38 : vector<1x8x24xf32> to vector<8x24xf32>
    %cst_30 = arith.constant dense<0.000000e+00> : vector<8x256xf32>
    %40 = tpu.matmul %39, %28, %cst_30 {dimension_numbers = #tpu.dot_dimension_numbers<[1], [0], [0], [1], [0, 0, 1, 1], [], []>} : vector<8x24xf32>, vector<24x256xf32>, vector<8x256xf32> -> vector<8x256xf32>
    %41 = arith.addf %37, %40 : vector<8x256xf32>
    %c2 = arith.constant 2 : index
    %c0_31 = arith.constant 0 : index
    %c0_32 = arith.constant 0 : index
    %42 = vector.load %arg6[%c2, %c0_31, %c0_32] : memref<3x8x24xf32, #tpu.memory_space<vmem>>, vector<1x8x24xf32>
    %43 = vector.shape_cast %42 : vector<1x8x24xf32> to vector<8x24xf32>
    %cst_33 = arith.constant dense<0.000000e+00> : vector<8x256xf32>
    %44 = tpu.matmul %43, %34, %cst_33 {dimension_numbers = #tpu.dot_dimension_numbers<[1], [0], [0], [1], [0, 0, 1, 1], [], []>} : vector<8x24xf32>, vector<24x256xf32>, vector<8x256xf32> -> vector<8x256xf32>
    %45 = arith.addf %41, %44 : vector<8x256xf32>
    %46 = vector.broadcast %3 : vector<8x1xf32> to vector<8x256xf32>
    %47 = arith.addf %45, %46 : vector<8x256xf32>
    %48 = arith.negf %47 : vector<8x256xf32>
    %49 = math.exp %48 : vector<8x256xf32>
    %cst_34 = arith.constant 1.000000e+00 : f32
    %50 = vector.broadcast %cst_34 : f32 to vector<8x256xf32>
    %51 = arith.addf %50, %49 : vector<8x256xf32>
    %52 = arith.divf %50, %51 : vector<8x256xf32>
    %53 = arith.subf %11, %9 : vector<8x256xf32>
    %54 = arith.mulf %52, %53 : vector<8x256xf32>
    %55 = arith.addf %9, %54 : vector<8x256xf32>
    %c0_35 = arith.constant 0 : index
    %c0_36 = arith.constant 0 : index
    %c0_37 = arith.constant 0 : index
    %56 = vector.load %arg12[%c0_35, %c0_36, %c0_37] : memref<2x8x256xf32, #tpu.memory_space<vmem>>, vector<1x8x256xf32>
    %57 = vector.shape_cast %56 : vector<1x8x256xf32> to vector<8x256xf32>
    %58 = vector.shape_cast %55 : vector<8x256xf32> to vector<1x8x256xf32>
    tpu.vector_store %arg12[%c0_35, %c0_36, %c0_37], %58 {strides = array<i32>} : memref<2x8x256xf32, #tpu.memory_space<vmem>>, vector<1x8x256xf32>,
    %c1_38 = arith.constant 1 : index
    %c0_39 = arith.constant 0 : index
    %c0_40 = arith.constant 0 : index
    %59 = vector.load %arg1[%c1_38, %c0_39, %c0_40] : memref<2x8x256xf32, #tpu.memory_space<vmem>>, vector<1x8x256xf32>
    %60 = vector.shape_cast %59 : vector<1x8x256xf32> to vector<8x256xf32>
    %c1_41 = arith.constant 1 : index
    %c0_42 = arith.constant 0 : index
    %c0_43 = arith.constant 0 : index
    %61 = vector.load %arg2[%c1_41, %c0_42, %c0_43] : memref<2x8x256xf32, #tpu.memory_space<vmem>>, vector<1x8x256xf32>
    %62 = vector.shape_cast %61 : vector<1x8x256xf32> to vector<8x256xf32>
    %cst_44 = arith.constant dense<0.000000e+00> : vector<8x256xf32>
    %63 = tpu.matmul %0, %60, %cst_44 {dimension_numbers = #tpu.dot_dimension_numbers<[1], [0], [0], [1], [0, 0, 1, 1], [], []>} : vector<8x8xf32>, vector<8x256xf32>, vector<8x256xf32> -> vector<8x256xf32>
    %cst_45 = arith.constant dense<0.000000e+00> : vector<8x256xf32>
    %64 = tpu.matmul %1, %62, %cst_45 {dimension_numbers = #tpu.dot_dimension_numbers<[1], [0], [0], [1], [0, 0, 1, 1], [], []>} : vector<8x8xf32>, vector<8x256xf32>, vector<8x256xf32> -> vector<8x256xf32>
    %65 = arith.addf %63, %64 : vector<8x256xf32>
    %66 = vector.broadcast %2 : vector<8x1xf32> to vector<8x256xf32>
    %67 = arith.addf %65, %66 : vector<8x256xf32>
    %cst_46 = arith.constant 0.000000e+00 : f32
    %68 = vector.broadcast %cst_46 : f32 to vector<8x256xf32>
    %69 = arith.cmpf ogt, %67, %68 : vector<8x256xf32>
    %cst_47 = arith.constant 0.00999999977 : f32
    %70 = vector.broadcast %cst_47 : f32 to vector<8x256xf32>
    %71 = arith.mulf %70, %67 : vector<8x256xf32>
    %72 = arith.select %69, %67, %71 : vector<8x256xi1>, vector<8x256xf32>
    %c16_i32_48 = arith.constant 16 : i32
    %73 = tpu.dynamic_rotate %72 by %c16_i32_48 dim 1 : vector<8x256xf32>, i32 -> vector<8x256xf32>
    %74 = vector.broadcast %4 : vector<1x256xf32> to vector<8x256xf32>
    %75 = arith.mulf %73, %74 : vector<8x256xf32>
    %c240_i32_49 = arith.constant 240 : i32
    %76 = tpu.dynamic_rotate %72 by %c240_i32_49 dim 1 : vector<8x256xf32>, i32 -> vector<8x256xf32>
    %77 = vector.broadcast %5 : vector<1x256xf32> to vector<8x256xf32>
    %78 = arith.mulf %76, %77 : vector<8x256xf32>
    %79 = tpu.concatenate %75, %72, %78 in 0 : vector<8x256xf32>, vector<8x256xf32>, vector<8x256xf32> -> vector<24x256xf32>
    %c1_i32_50 = arith.constant 1 : i32
    %80 = tpu.dynamic_rotate %79 by %c1_i32_50 dim 1 : vector<24x256xf32>, i32 -> vector<24x256xf32>
    %81 = vector.broadcast %6 : vector<1x256xf32> to vector<24x256xf32>
    %82 = arith.mulf %80, %81 : vector<24x256xf32>
    %c255_i32_51 = arith.constant 255 : i32
    %83 = tpu.dynamic_rotate %79 by %c255_i32_51 dim 1 : vector<24x256xf32>, i32 -> vector<24x256xf32>
    %84 = vector.broadcast %7 : vector<1x256xf32> to vector<24x256xf32>
    %85 = arith.mulf %83, %84 : vector<24x256xf32>
    %c0_52 = arith.constant 0 : index
    %c0_53 = arith.constant 0 : index
    %c0_54 = arith.constant 0 : index
    %86 = vector.load %arg6[%c0_52, %c0_53, %c0_54] : memref<3x8x24xf32, #tpu.memory_space<vmem>>, vector<1x8x24xf32>
    %87 = vector.shape_cast %86 : vector<1x8x24xf32> to vector<8x24xf32>
    %cst_55 = arith.constant dense<0.000000e+00> : vector<8x256xf32>
    %88 = tpu.matmul %87, %82, %cst_55 {dimension_numbers = #tpu.dot_dimension_numbers<[1], [0], [0], [1], [0, 0, 1, 1], [], []>} : vector<8x24xf32>, vector<24x256xf32>, vector<8x256xf32> -> vector<8x256xf32>
    %c1_56 = arith.constant 1 : index
    %c0_57 = arith.constant 0 : index
    %c0_58 = arith.constant 0 : index
    %89 = vector.load %arg6[%c1_56, %c0_57, %c0_58] : memref<3x8x24xf32, #tpu.memory_space<vmem>>, vector<1x8x24xf32>
    %90 = vector.shape_cast %89 : vector<1x8x24xf32> to vector<8x24xf32>
    %cst_59 = arith.constant dense<0.000000e+00> : vector<8x256xf32>
    %91 = tpu.matmul %90, %79, %cst_59 {dimension_numbers = #tpu.dot_dimension_numbers<[1], [0], [0], [1], [0, 0, 1, 1], [], []>} : vector<8x24xf32>, vector<24x256xf32>, vector<8x256xf32> -> vector<8x256xf32>
    %92 = arith.addf %88, %91 : vector<8x256xf32>
    %c2_60 = arith.constant 2 : index
    %c0_61 = arith.constant 0 : index
    %c0_62 = arith.constant 0 : index
    %93 = vector.load %arg6[%c2_60, %c0_61, %c0_62] : memref<3x8x24xf32, #tpu.memory_space<vmem>>, vector<1x8x24xf32>
    %94 = vector.shape_cast %93 : vector<1x8x24xf32> to vector<8x24xf32>
    %cst_63 = arith.constant dense<0.000000e+00> : vector<8x256xf32>
    %95 = tpu.matmul %94, %85, %cst_63 {dimension_numbers = #tpu.dot_dimension_numbers<[1], [0], [0], [1], [0, 0, 1, 1], [], []>} : vector<8x24xf32>, vector<24x256xf32>, vector<8x256xf32> -> vector<8x256xf32>
    %96 = arith.addf %92, %95 : vector<8x256xf32>
    %97 = vector.broadcast %3 : vector<8x1xf32> to vector<8x256xf32>
    %98 = arith.addf %96, %97 : vector<8x256xf32>
    %99 = arith.negf %98 : vector<8x256xf32>
    %100 = math.exp %99 : vector<8x256xf32>
    %cst_64 = arith.constant 1.000000e+00 : f32
    %101 = vector.broadcast %cst_64 : f32 to vector<8x256xf32>
    %102 = arith.addf %101, %100 : vector<8x256xf32>
    %103 = arith.divf %101, %102 : vector<8x256xf32>
    %104 = arith.subf %62, %60 : vector<8x256xf32>
    %105 = arith.mulf %103, %104 : vector<8x256xf32>
    %106 = arith.addf %60, %105 : vector<8x256xf32>
    %c1_65 = arith.constant 1 : index
    %c0_66 = arith.constant 0 : index
    %c0_67 = arith.constant 0 : index
    %107 = vector.load %arg12[%c1_65, %c0_66, %c0_67] : memref<2x8x256xf32, #tpu.memory_space<vmem>>, vector<1x8x256xf32>
    %108 = vector.shape_cast %107 : vector<1x8x256xf32> to vector<8x256xf32>
    %109 = vector.shape_cast %106 : vector<8x256xf32> to vector<1x8x256xf32>
    tpu.vector_store %arg12[%c1_65, %c0_66, %c0_67], %109 {strides = array<i32>} : memref<2x8x256xf32, #tpu.memory_space<vmem>>, vector<1x8x256xf32>,
    return
  }
  func.func @transform_0(%arg0: i32) -> (i32, i32, i32) {
    %c0_i32 = arith.constant 0 : i32
    %c0_i32_0 = arith.constant 0 : i32
    %c0_i32_1 = arith.constant 0 : i32
    return %arg0, %c0_i32, %c0_i32_0 : i32, i32, i32
  }
  func.func @transform_1(%arg0: i32) -> (i32, i32, i32) {
    %c0_i32 = arith.constant 0 : i32
    %c0_i32_0 = arith.constant 0 : i32
    %c0_i32_1 = arith.constant 0 : i32
    return %arg0, %c0_i32, %c0_i32_0 : i32, i32, i32
  }
  func.func @transform_2(%arg0: i32) -> (i32, i32) {
    %c0_i32 = arith.constant 0 : i32
    %c0_i32_0 = arith.constant 0 : i32
    %c0_i32_1 = arith.constant 0 : i32
    return %c0_i32, %c0_i32_0 : i32, i32
  }
  func.func @transform_3(%arg0: i32) -> (i32, i32) {
    %c0_i32 = arith.constant 0 : i32
    %c0_i32_0 = arith.constant 0 : i32
    %c0_i32_1 = arith.constant 0 : i32
    return %c0_i32, %c0_i32_0 : i32, i32
  }
  func.func @transform_4(%arg0: i32) -> (i32, i32) {
    %c0_i32 = arith.constant 0 : i32
    %c0_i32_0 = arith.constant 0 : i32
    %c0_i32_1 = arith.constant 0 : i32
    return %c0_i32, %c0_i32_0 : i32, i32
  }
  func.func @transform_5(%arg0: i32) -> (i32, i32, i32) {
    %c0_i32 = arith.constant 0 : i32
    %c0_i32_0 = arith.constant 0 : i32
    %c0_i32_1 = arith.constant 0 : i32
    %c0_i32_2 = arith.constant 0 : i32
    return %c0_i32, %c0_i32_0, %c0_i32_1 : i32, i32, i32
  }
  func.func @transform_6(%arg0: i32) -> (i32, i32) {
    %c0_i32 = arith.constant 0 : i32
    %c0_i32_0 = arith.constant 0 : i32
    %c0_i32_1 = arith.constant 0 : i32
    return %c0_i32, %c0_i32_0 : i32, i32
  }
  func.func @transform_7(%arg0: i32) -> (i32, i32) {
    %c0_i32 = arith.constant 0 : i32
    %c0_i32_0 = arith.constant 0 : i32
    %c0_i32_1 = arith.constant 0 : i32
    return %c0_i32, %c0_i32_0 : i32, i32
  }
  func.func @transform_8(%arg0: i32) -> (i32, i32) {
    %c0_i32 = arith.constant 0 : i32
    %c0_i32_0 = arith.constant 0 : i32
    %c0_i32_1 = arith.constant 0 : i32
    return %c0_i32, %c0_i32_0 : i32, i32
  }
  func.func @transform_9(%arg0: i32) -> (i32, i32) {
    %c0_i32 = arith.constant 0 : i32
    %c0_i32_0 = arith.constant 0 : i32
    %c0_i32_1 = arith.constant 0 : i32
    return %c0_i32, %c0_i32_0 : i32, i32
  }
  func.func @transform_10(%arg0: i32) -> (i32, i32) {
    %c0_i32 = arith.constant 0 : i32
    %c0_i32_0 = arith.constant 0 : i32
    %c0_i32_1 = arith.constant 0 : i32
    return %c0_i32, %c0_i32_0 : i32, i32
  }
  func.func @transform_11(%arg0: i32) -> (i32, i32, i32) {
    %c0_i32 = arith.constant 0 : i32
    %c0_i32_0 = arith.constant 0 : i32
    %c0_i32_1 = arith.constant 0 : i32
    return %arg0, %c0_i32, %c0_i32_0 : i32, i32, i32
  }
}

</mosaic_0001>

<llo_original>
// kernel: tpu_custom_call.1
$region0: #{tpu_custom_call.1}
  #allocation0 [shape = 'u32[]', space=smem, size = 0x4, offset = 0x4, fixed_abs, tag = 'smem constant byte address 0x4 - core index']
  #allocation1 [shape = 'u32[144,128]{1,0:T(1,128)}', space=vmem, size = 0x12000, scoped, tag = 'internal scratch']
  %s0 = inlined_call_operand.hbm [shape: f32[2,8,256], index: 0, kind: input, shape index: {}]
  %s1 = inlined_call_operand.hbm [shape: f32[2,8,256], index: 1, kind: input, shape index: {}]
  %s2 = inlined_call_operand.vmem [shape: f32[8,8], index: 2, kind: input, shape index: {}]
  %s3 = inlined_call_operand.hbm [shape: f32[8,8], index: 3, kind: input, shape index: {}]
  %s4 = inlined_call_operand.vmem [shape: f32[8,1], index: 4, kind: input, shape index: {}]
  %s5 = inlined_call_operand.vmem [shape: f32[3,8,24], index: 5, kind: input, shape index: {}]
  %s6 = inlined_call_operand.vmem [shape: f32[8,1], index: 6, kind: input, shape index: {}]
  %s7 = inlined_call_operand.vmem [shape: f32[1,256], index: 7, kind: input, shape index: {}]
  %s8 = inlined_call_operand.vmem [shape: f32[1,256], index: 8, kind: input, shape index: {}]
  %s9 = inlined_call_operand.vmem [shape: f32[1,256], index: 9, kind: input, shape index: {}]
  %s10 = inlined_call_operand.vmem [shape: f32[1,256], index: 10, kind: input, shape index: {}]
  %s11 = inlined_call_operand.hbm [shape: f32[2,8,256], index: 11, kind: output, shape index: {}]
  %s12 = sld [smem:[#allocation0]]
  $region66: #{tpu_custom_call.1} parent=0
    _
  %s14 = ssub.s32 1, %s12
  %s15 = scalar_select 0, %s14, %s12
  $region1: #{tpu_custom_call.1} parent=0
    #allocation2 [shape = 'u8[16384]{0}', space=vmem, size = 0x4000, scoped, tag = 'input window, operand 0, single buffered']
    #allocation3 [shape = 's32[1]{0}', space=sflag, size = 0x4, scoped, tag = 'scoped memory for tpu_custom_call.1']
    #allocation4 [shape = 's32[1]{0}', space=sflag, size = 0x4, scoped, tag = 'scoped memory for tpu_custom_call.1']
    #allocation5 [shape = 'u8[16384]{0}', space=vmem, size = 0x4000, scoped, tag = 'input window, operand 1, single buffered']
    #allocation6 [shape = 's32[1]{0}', space=sflag, size = 0x4, scoped, tag = 'scoped memory for tpu_custom_call.1']
    #allocation7 [shape = 'u8[4096]{0}', space=vmem, size = 0x1000, scoped, tag = 'input window, operand 3, single buffered']
    #allocation8 [shape = 'u8[16384]{0}', space=vmem, size = 0x4000, scoped, tag = 'output window, operand 0, single buffered']
    %16 = vsyncpa [#allocation3], 0
    %17 = vsyncpa [#allocation6], 0
    %18 = vsyncpa [#allocation4], 0
    // Predicated region
    $region2: #{tpu_custom_call.1} parent=1 // pred_check
      _
    $region3: #{tpu_custom_call.1} parent=1 // pred_check_branch
      %20 = sbr.rel (0) target = $region5
    $region4: #{tpu_custom_call.1} parent=1 // pred_region
      %s22 = ssub.s32 512, 512
      %23 = vsyncadd [#allocation3], %s22
      %s24 = sshll.u32 [#allocation2], 4
      %s25 = int_to_ptr.vmem [resolvable:$true] %s24
      %30 = dma.hbm_to_vmem [thread:$0]  %s0, 512, %s25, [#allocation3], 256, 256, 16
    $region5: #{tpu_custom_call.1} parent=1 // pred_fallthru
      _
    // Predicated region
    $region6: #{tpu_custom_call.1} parent=1 // pred_check
      _
    $region7: #{tpu_custom_call.1} parent=1 // pred_check_branch
      %32 = sbr.rel (0) target = $region9
    $region8: #{tpu_custom_call.1} parent=1 // pred_region
      %s34 = ssub.s32 512, 512
      %35 = vsyncadd [#allocation6], %s34
      %s36 = sshll.u32 [#allocation5], 4
      %s37 = int_to_ptr.vmem [resolvable:$true] %s36
      %42 = dma.hbm_to_vmem [thread:$0]  %s1, 512, %s37, [#allocation6], 256, 256, 16
    $region9: #{tpu_custom_call.1} parent=1 // pred_fallthru
      _
    // Predicated region
    $region10: #{tpu_custom_call.1} parent=1 // pred_check
      _
    $region11: #{tpu_custom_call.1} parent=1 // pred_check_branch
      %44 = sbr.rel (0) target = $region13
    $region12: #{tpu_custom_call.1} parent=1 // pred_region
      _
    $region13: #{tpu_custom_call.1} parent=1 // pred_fallthru
      _
    // Predicated region
    $region14: #{tpu_custom_call.1} parent=1 // pred_check
      _
    $region15: #{tpu_custom_call.1} parent=1 // pred_check_branch
      %46 = sbr.rel (0) target = $region17
    $region16: #{tpu_custom_call.1} parent=1 // pred_region
      %s48 = ssub.s32 128, 128
      %49 = vsyncadd [#allocation6], %s48
      %s51 = sshll.u32 [#allocation7], 4
      %s52 = int_to_ptr.vmem [resolvable:$true] %s51
      %54 = dma.hbm_to_vmem [thread:$0]  %s3, 128, %s52, [#allocation6]
    $region17: #{tpu_custom_call.1} parent=1 // pred_fallthru
      _
    // Predicated region
    $region18: #{tpu_custom_call.1} parent=1 // pred_check
      _
    $region19: #{tpu_custom_call.1} parent=1 // pred_check_branch
      %56 = sbr.rel (0) target = $region21
    $region20: #{tpu_custom_call.1} parent=1 // pred_region
      _
    $region21: #{tpu_custom_call.1} parent=1 // pred_fallthru
      _
    // Predicated region
    $region22: #{tpu_custom_call.1} parent=1 // pred_check
      _
    $region23: #{tpu_custom_call.1} parent=1 // pred_check_branch
      %58 = sbr.rel (0) target = $region25
    $region24: #{tpu_custom_call.1} parent=1 // pred_region
      _
    $region25: #{tpu_custom_call.1} parent=1 // pred_fallthru
      _
    // Predicated region
    $region26: #{tpu_custom_call.1} parent=1 // pred_check
      _
    $region27: #{tpu_custom_call.1} parent=1 // pred_check_branch
      %60 = sbr.rel (0) target = $region29
    $region28: #{tpu_custom_call.1} parent=1 // pred_region
      _
    $region29: #{tpu_custom_call.1} parent=1 // pred_fallthru
      _
    // Predicated region
    $region30: #{tpu_custom_call.1} parent=1 // pred_check
      _
    $region31: #{tpu_custom_call.1} parent=1 // pred_check_branch
      %62 = sbr.rel (0) target = $region33
    $region32: #{tpu_custom_call.1} parent=1 // pred_region
      _
    $region33: #{tpu_custom_call.1} parent=1 // pred_fallthru
      _
    // Predicated region
    $region34: #{tpu_custom_call.1} parent=1 // pred_check
      _
    $region35: #{tpu_custom_call.1} parent=1 // pred_check_branch
      %64 = sbr.rel (0) target = $region37
    $region36: #{tpu_custom_call.1} parent=1 // pred_region
      _
    $region37: #{tpu_custom_call.1} parent=1 // pred_fallthru
      _
    // Predicated region
    $region38: #{tpu_custom_call.1} parent=1 // pred_check
      _
    $region39: #{tpu_custom_call.1} parent=1 // pred_check_branch
      %66 = sbr.rel (0) target = $region41
    $region40: #{tpu_custom_call.1} parent=1 // pred_region
      _
    $region41: #{tpu_custom_call.1} parent=1 // pred_fallthru
      _
    // Predicated region
    $region42: #{tpu_custom_call.1} parent=1 // pred_check
      _
    $region43: #{tpu_custom_call.1} parent=1 // pred_check_branch
      %68 = sbr.rel (0) target = $region45
    $region44: #{tpu_custom_call.1} parent=1 // pred_region
      _
    $region45: #{tpu_custom_call.1} parent=1 // pred_fallthru
      _
    // Predicated region
    $region46: #{tpu_custom_call.1} parent=1 // pred_check
      _
    $region47: #{tpu_custom_call.1} parent=1 // pred_check_branch
      %70 = sbr.rel (0) target = $region49
    $region48: #{tpu_custom_call.1} parent=1 // pred_region
      %71 = dma.done [#allocation3], 512
    $region49: #{tpu_custom_call.1} parent=1 // pred_fallthru
      _
    // Predicated region
    $region50: #{tpu_custom_call.1} parent=1 // pred_check
      _
    $region51: #{tpu_custom_call.1} parent=1 // pred_check_branch
      %73 = sbr.rel (0) target = $region53
    $region52: #{tpu_custom_call.1} parent=1 // pred_region
      %74 = dma.done [#allocation6], 512
    $region53: #{tpu_custom_call.1} parent=1 // pred_fallthru
      _
    // Predicated region
    $region54: #{tpu_custom_call.1} parent=1 // pred_check
      _
    $region55: #{tpu_custom_call.1} parent=1 // pred_check_branch
      %76 = sbr.rel (0) target = $region57
    $region56: #{tpu_custom_call.1} parent=1 // pred_region
      %77 = dma.done [#allocation6], 128
    $region57: #{tpu_custom_call.1} parent=1 // pred_fallthru
      _
    %v78 = vld [vmem:[%s2] sm:$0xff]
    %v79 = vld [vmem:[#allocation7] sm:$0xff]
    %v80 = vld [vmem:[%s4] sm:$0xff]
    %v81 = vld [vmem:[%s6] sm:$0xff]
    %v82 = vld [vmem:[%s7] sm:$0x3]
    %v83 = vld [vmem:[%s8] sm:$0x3]
    %v84 = vld [vmem:[%s9] sm:$0x3]
    %v85 = vld [vmem:[%s10] sm:$0x3]
    %v86 = vld [vmem:[#allocation2] sm:$0xff]
    %v87 = vld [vmem:[#allocation2 + $0x8] sm:$0xff]
    %v88 = vld [vmem:[#allocation5] sm:$0xff]
    %v89 = vld [vmem:[#allocation5 + $0x8] sm:$0xff]
    %vm90 = vcmask 64512
    %v92 = vsel %vm90, %v79, 0
    %94 = vmatprep.subr.mxu0 %v89
    %95 = vmatpush1.msra.mxu0 %v88
    %96 = vmatprep.subr.mxu0 0.0
    %97 = vmatpush1.msra.mxu0 0.0
    %98 = vmatprep.subr.mxu0 0.0
    %99 = vmatpush1.msra.mxu0 0.0
    %100 = vmatprep.subr.mxu0 0.0
    %101 = vmatpush1.msra.mxu0 0.0
    %102 = vmatprep.subr.mxu0 0.0
    %103 = vmatpush1.msra.mxu0 0.0
    %104 = vmatprep.subr.mxu0 0.0
    %105 = vmatpush1.msra.mxu0 0.0
    %106 = vmatprep.subr.mxu0 0.0
    %107 = vmatpush1.msra.mxu0 0.0
    %108 = vmatprep.subr.mxu0 0.0
    %109 = vmatpush1.msra.mxu0 0.0
    %110 = vmatprep.subr.mxu0 0.0
    %111 = vmatpush1.msra.mxu0 0.0
    %112 = vmatprep.subr.mxu0 0.0
    %113 = vmatpush1.msra.mxu0 0.0
    %114 = vmatprep.subr.mxu0 0.0
    %115 = vmatpush1.msra.mxu0 0.0
    %116 = vmatprep.subr.mxu0 0.0
    %117 = vmatpush1.msra.mxu0 0.0
    %118 = vmatprep.subr.mxu0 0.0
    %119 = vmatpush1.msra.mxu0 0.0
    %120 = vmatprep.subr.mxu0 0.0
    %121 = vmatpush1.msra.mxu0 0.0
    %122 = vmatprep.subr.mxu0 0.0
    %123 = vmatpush1.msra.mxu0 0.0
    %124 = vmatprep.subr.mxu0 0.0
    %125 = vmatpush1.msra.mxu0 0.0
    %126 = vmatprep.subr.mxu0 0.0
    %127 = vmatpush1.msra.mxu0 0.0
    %128 = vmatprep.subr.mxu0 0.0
    %129 = vmatpush1.msra.mxu0 0.0
    %130 = vmatprep.subr.mxu0 0.0
    %131 = vmatpush1.msra.mxu0 0.0
    %132 = vmatprep.subr.mxu0 0.0
    %133 = vmatpush1.msra.mxu0 0.0
    %134 = vmatprep.subr.mxu0 0.0
    %135 = vmatpush1.msra.mxu0 0.0
    %136 = vmatprep.subr.mxu0 0.0
    %137 = vmatpush1.msra.mxu0 0.0
    %138 = vmatprep.subr.mxu0 0.0
    %139 = vmatpush1.msra.mxu0 0.0
    %140 = vmatprep.subr.mxu0 0.0
    %141 = vmatpush1.msra.mxu0 0.0
    %142 = vmatprep.subr.mxu0 0.0
    %143 = vmatpush1.msra.mxu0 0.0
    %144 = vmatprep.subr.mxu0 0.0
    %145 = vmatpush1.msra.mxu0 0.0
    %146 = vmatprep.subr.mxu0 0.0
    %147 = vmatpush1.msra.mxu0 0.0
    %148 = vmatprep.subr.mxu0 0.0
    %149 = vmatpush1.msra.mxu0 0.0
    %150 = vmatprep.subr.mxu0 0.0
    %151 = vmatpush1.msra.mxu0 0.0
    %152 = vmatprep.subr.mxu0 0.0
    %153 = vmatpush1.msra.mxu0 0.0
    %154 = vmatprep.subr.mxu0 0.0
    %155 = vmatpush1.msra.mxu0 0.0
    %156 = vmatprep.subr.mxu0 0.0
    %157 = vmatpush1.msra.mxu0 0.0
    %158 = vmatprep.mubr.f32.mxu0 0.0
    %159 = vmatmul.mubr.f32.gmra.mrb[0].mxu0 %v92
    %v160 = vpop.f32.mrb[0].mxu0
    %v161 = vadd.f32 0.0, %v160
    %v162 = vpop.f32.mrb[0].mxu0
    %v163 = vadd.f32 0.0, %v162
    %164 = vdwg.mxu0
    %v166 = vsel %vm90, %v78, 0
    %168 = vmatprep.subr.mxu0 %v87
    %169 = vmatpush1.msra.mxu0 %v86
    %170 = vmatprep.subr.mxu0 0.0
    %171 = vmatpush1.msra.mxu0 0.0
    %172 = vmatprep.subr.mxu0 0.0
    %173 = vmatpush1.msra.mxu0 0.0
    %174 = vmatprep.subr.mxu0 0.0
    %175 = vmatpush1.msra.mxu0 0.0
    %176 = vmatprep.subr.mxu0 0.0
    %177 = vmatpush1.msra.mxu0 0.0
    %178 = vmatprep.subr.mxu0 0.0
    %179 = vmatpush1.msra.mxu0 0.0
    %180 = vmatprep.subr.mxu0 0.0
    %181 = vmatpush1.msra.mxu0 0.0
    %182 = vmatprep.subr.mxu0 0.0
    %183 = vmatpush1.msra.mxu0 0.0
    %184 = vmatprep.subr.mxu0 0.0
    %185 = vmatpush1.msra.mxu0 0.0
    %186 = vmatprep.subr.mxu0 0.0
    %187 = vmatpush1.msra.mxu0 0.0
    %188 = vmatprep.subr.mxu0 0.0
    %189 = vmatpush1.msra.mxu0 0.0
    %190 = vmatprep.subr.mxu0 0.0
    %191 = vmatpush1.msra.mxu0 0.0
    %192 = vmatprep.subr.mxu0 0.0
    %193 = vmatpush1.msra.mxu0 0.0
    %194 = vmatprep.subr.mxu0 0.0
    %195 = vmatpush1.msra.mxu0 0.0
    %196 = vmatprep.subr.mxu0 0.0
    %197 = vmatpush1.msra.mxu0 0.0
    %198 = vmatprep.subr.mxu0 0.0
    %199 = vmatpush1.msra.mxu0 0.0
    %200 = vmatprep.subr.mxu0 0.0
    %201 = vmatpush1.msra.mxu0 0.0
    %202 = vmatprep.subr.mxu0 0.0
    %203 = vmatpush1.msra.mxu0 0.0
    %204 = vmatprep.subr.mxu0 0.0
    %205 = vmatpush1.msra.mxu0 0.0
    %206 = vmatprep.subr.mxu0 0.0
    %207 = vmatpush1.msra.mxu0 0.0
    %208 = vmatprep.subr.mxu0 0.0
    %209 = vmatpush1.msra.mxu0 0.0
    %210 = vmatprep.subr.mxu0 0.0
    %211 = vmatpush1.msra.mxu0 0.0
    %212 = vmatprep.subr.mxu0 0.0
    %213 = vmatpush1.msra.mxu0 0.0
    %214 = vmatprep.subr.mxu0 0.0
    %215 = vmatpush1.msra.mxu0 0.0
    %216 = vmatprep.subr.mxu0 0.0
    %217 = vmatpush1.msra.mxu0 0.0
    %218 = vmatprep.subr.mxu0 0.0
    %219 = vmatpush1.msra.mxu0 0.0
    %220 = vmatprep.subr.mxu0 0.0
    %221 = vmatpush1.msra.mxu0 0.0
    %222 = vmatprep.subr.mxu0 0.0
    %223 = vmatpush1.msra.mxu0 0.0
    %224 = vmatprep.subr.mxu0 0.0
    %225 = vmatpush1.msra.mxu0 0.0
    %226 = vmatprep.subr.mxu0 0.0
    %227 = vmatpush1.msra.mxu0 0.0
    %228 = vmatprep.subr.mxu0 0.0
    %229 = vmatpush1.msra.mxu0 0.0
    %230 = vmatprep.subr.mxu0 0.0
    %231 = vmatpush1.msra.mxu0 0.0
    %232 = vmatprep.mubr.f32.mxu0 0.0
    %233 = vmatmul.mubr.f32.gmra.mrb[0].mxu0 %v166
    %v234 = vpop.f32.mrb[0].mxu0
    %v235 = vadd.f32 %v161, %v234
    %v236 = vpop.f32.mrb[0].mxu0
    %v237 = vadd.f32 %v163, %v236
    %238 = vdwg.mxu0
    %240 = vset.pattern.permute.xlu0 0
    %241 = vperm.xlu0 %240, %v80
    %v242 = vpop.permute.xlu0 %241
    %v244 = vadd.f32 %v235, %v242
    %v245 = vadd.f32 %v237, %v242
    %vm246 = vcmp.gt.f32.partialorder %v244, 0.0
    %vm247 = vcmp.gt.f32.partialorder %v245, 0.0
    %v248 = vmul.f32 %v244, 0.01
    %v249 = vmul.f32 %v245, 0.01
    %v250 = vsel %vm246, %v244, %v248
    %v251 = vsel %vm247, %v245, %v249
    %252 = vrot.lane.b32.xlu0 %v250, 16
    %v253 = vpop.permute.xlu0 %252
    %254 = vrot.lane.b32.xlu0 %v251, 16
    %v255 = vpop.permute.xlu0 %254
    %v256 = vlaneseq
    %v257 = vand.u32 %v256, 127
    %vm258 = vcmp.lt.s32.totalorder %v257, 16
    %v259 = vsel %vm258, %v253, %v255
    %v260 = vsel %vm258, %v255, %v253
    %v262 = vlaneseq
    %v263 = vshrl.u32 %v262, 7
    %v264 = vsub.s32 0, %v263
    %v265 = vrot.slane %v82, %v264
    %v266 = vlaneseq
    %v267 = vshrl.u32 %v266, 7
    %v268 = vsub.s32 1, %v267
    %v269 = vrot.slane %v82, %v268
    %v272 = vmul.f32 %v260, %v265
    %v273 = vmul.f32 %v259, %v269
    %274 = vrot.lane.b32.xlu0 %v250, 112
    %v275 = vpop.permute.xlu0 %274
    %276 = vrot.lane.b32.xlu0 %v251, 112
    %v277 = vpop.permute.xlu0 %276
    %vm278 = vcmp.lt.s32.totalorder %v257, 112
    %v279 = vsel %vm278, %v275, %v277
    %v280 = vsel %vm278, %v277, %v275
    %v282 = vlaneseq
    %v283 = vshrl.u32 %v282, 7
    %v284 = vsub.s32 0, %v283
    %v285 = vrot.slane %v83, %v284
    %v286 = vlaneseq
    %v287 = vshrl.u32 %v286, 7
    %v288 = vsub.s32 1, %v287
    %v289 = vrot.slane %v83, %v288
    %v292 = vmul.f32 %v279, %v285
    %v293 = vmul.f32 %v280, %v289
    %294 = vrot.lane.b32.xlu0 %v272, 1
    %v295 = vpop.permute.xlu0 %294
    %296 = vrot.lane.b32.xlu0 %v250, 1
    %v297 = vpop.permute.xlu0 %296
    %298 = vrot.lane.b32.xlu0 %v292, 1
    %v299 = vpop.permute.xlu0 %298
    %300 = vrot.lane.b32.xlu0 %v273, 1
    %v301 = vpop.permute.xlu0 %300
    %302 = vrot.lane.b32.xlu0 %v251, 1
    %v303 = vpop.permute.xlu0 %302
    %304 = vrot.lane.b32.xlu0 %v293, 1
    %v305 = vpop.permute.xlu0 %304
    %vm306 = vcmp.lt.s32.totalorder %v257, 1
    %v307 = vsel %vm306, %v295, %v301
    %v308 = vsel %vm306, %v297, %v303
    %v309 = vsel %vm306, %v299, %v305
    %v310 = vsel %vm306, %v301, %v295
    %v311 = vsel %vm306, %v303, %v297
    %v312 = vsel %vm306, %v305, %v299
    %v314 = vlaneseq
    %v315 = vshrl.u32 %v314, 7
    %v316 = vsub.s32 0, %v315
    %v317 = vrot.slane %v84, %v316
    %v318 = vlaneseq
    %v319 = vshrl.u32 %v318, 7
    %v320 = vsub.s32 1, %v319
    %v321 = vrot.slane %v84, %v320
    %v324 = vmul.f32 %v310, %v317
    %v325 = vmul.f32 %v307, %v321
    %v326 = vmul.f32 %v311, %v317
    %v327 = vmul.f32 %v308, %v321
    %v328 = vmul.f32 %v312, %v317
    %v329 = vmul.f32 %v309, %v321
    %330 = vrot.lane.b32.xlu0 %v272, 127
    %v331 = vpop.permute.xlu0 %330
    %332 = vrot.lane.b32.xlu0 %v250, 127
    %v333 = vpop.permute.xlu0 %332
    %334 = vrot.lane.b32.xlu0 %v292, 127
    %v335 = vpop.permute.xlu0 %334
    %336 = vrot.lane.b32.xlu0 %v273, 127
    %v337 = vpop.permute.xlu0 %336
    %338 = vrot.lane.b32.xlu0 %v251, 127
    %v339 = vpop.permute.xlu0 %338
    %340 = vrot.lane.b32.xlu0 %v293, 127
    %v341 = vpop.permute.xlu0 %340
    %vm342 = vcmp.lt.s32.totalorder %v257, 127
    %v343 = vsel %vm342, %v331, %v337
    %v344 = vsel %vm342, %v333, %v339
    %v345 = vsel %vm342, %v335, %v341
    %v346 = vsel %vm342, %v337, %v331
    %v347 = vsel %vm342, %v339, %v333
    %v348 = vsel %vm342, %v341, %v335
    %v350 = vlaneseq
    %v351 = vshrl.u32 %v350, 7
    %v352 = vsub.s32 0, %v351
    %v353 = vrot.slane %v85, %v352
    %v354 = vlaneseq
    %v355 = vshrl.u32 %v354, 7
    %v356 = vsub.s32 1, %v355
    %v357 = vrot.slane %v85, %v356
    %v360 = vmul.f32 %v343, %v353
    %v361 = vmul.f32 %v346, %v357
    %v362 = vmul.f32 %v344, %v353
    %v363 = vmul.f32 %v347, %v357
    %v364 = vmul.f32 %v345, %v353
    %v365 = vmul.f32 %v348, %v357
    %v366 = vld [vmem:[%s5] sm:$0xff]
    %s367 = scalar_lea.vmem %s5, 8
    %v368 = vld [vmem:[%s367] sm:$0xff]
    %vm369 = vcmask 195584
    %v371 = vsel %vm369, %v368, 0
    %373 = vmatprep.subr.mxu0 %v273
    %374 = vmatpush1.msra.mxu0 %v272
    %375 = vmatprep.subr.mxu0 %v251
    %376 = vmatpush1.msra.mxu0 %v250
    %377 = vmatprep.subr.mxu0 %v293
    %378 = vmatpush1.msra.mxu0 %v292
    %379 = vmatprep.subr.mxu0 0.0
    %380 = vmatpush1.msra.mxu0 0.0
    %381 = vmatprep.subr.mxu0 0.0
    %382 = vmatpush1.msra.mxu0 0.0
    %383 = vmatprep.subr.mxu0 0.0
    %384 = vmatpush1.msra.mxu0 0.0
    %385 = vmatprep.subr.mxu0 0.0
    %386 = vmatpush1.msra.mxu0 0.0
    %387 = vmatprep.subr.mxu0 0.0
    %388 = vmatpush1.msra.mxu0 0.0
    %389 = vmatprep.subr.mxu0 0.0
    %390 = vmatpush1.msra.mxu0 0.0
    %391 = vmatprep.subr.mxu0 0.0
    %392 = vmatpush1.msra.mxu0 0.0
    %393 = vmatprep.subr.mxu0 0.0
    %394 = vmatpush1.msra.mxu0 0.0
    %395 = vmatprep.subr.mxu0 0.0
    %396 = vmatpush1.msra.mxu0 0.0
    %397 = vmatprep.subr.mxu0 0.0
    %398 = vmatpush1.msra.mxu0 0.0
    %399 = vmatprep.subr.mxu0 0.0
    %400 = vmatpush1.msra.mxu0 0.0
    %401 = vmatprep.subr.mxu0 0.0
    %402 = vmatpush1.msra.mxu0 0.0
    %403 = vmatprep.subr.mxu0 0.0
    %404 = vmatpush1.msra.mxu0 0.0
    %405 = vmatprep.subr.mxu0 0.0
    %406 = vmatpush1.msra.mxu0 0.0
    %407 = vmatprep.subr.mxu0 0.0
    %408 = vmatpush1.msra.mxu0 0.0
    %409 = vmatprep.subr.mxu0 0.0
    %410 = vmatpush1.msra.mxu0 0.0
    %411 = vmatprep.subr.mxu0 0.0
    %412 = vmatpush1.msra.mxu0 0.0
    %413 = vmatprep.subr.mxu0 0.0
    %414 = vmatpush1.msra.mxu0 0.0
    %415 = vmatprep.subr.mxu0 0.0
    %416 = vmatpush1.msra.mxu0 0.0
    %417 = vmatprep.subr.mxu0 0.0
    %418 = vmatpush1.msra.mxu0 0.0
    %419 = vmatprep.subr.mxu0 0.0
    %420 = vmatpush1.msra.mxu0 0.0
    %421 = vmatprep.subr.mxu0 0.0
    %422 = vmatpush1.msra.mxu0 0.0
    %423 = vmatprep.subr.mxu0 0.0
    %424 = vmatpush1.msra.mxu0 0.0
    %425 = vmatprep.subr.mxu0 0.0
    %426 = vmatpush1.msra.mxu0 0.0
    %427 = vmatprep.subr.mxu0 0.0
    %428 = vmatpush1.msra.mxu0 0.0
    %429 = vmatprep.subr.mxu0 0.0
    %430 = vmatpush1.msra.mxu0 0.0
    %431 = vmatprep.subr.mxu0 0.0
    %432 = vmatpush1.msra.mxu0 0.0
    %433 = vmatprep.subr.mxu0 0.0
    %434 = vmatpush1.msra.mxu0 0.0
    %435 = vmatprep.subr.mxu0 0.0
    %436 = vmatpush1.msra.mxu0 0.0
    %437 = vmatprep.mubr.f32.mxu0 0.0
    %438 = vmatmul.mubr.f32.gmra.mrb[0].mxu0 %v371
    %v439 = vpop.f32.mrb[0].mxu0
    %v440 = vadd.f32 0.0, %v439
    %v441 = vpop.f32.mrb[0].mxu0
    %v442 = vadd.f32 0.0, %v441
    %443 = vdwg.mxu0
    %v445 = vsel %vm369, %v366, 0
    %447 = vmatprep.subr.mxu0 %v325
    %448 = vmatpush1.msra.mxu0 %v324
    %449 = vmatprep.subr.mxu0 %v327
    %450 = vmatpush1.msra.mxu0 %v326
    %451 = vmatprep.subr.mxu0 %v329
    %452 = vmatpush1.msra.mxu0 %v328
    %453 = vmatprep.subr.mxu0 0.0
    %454 = vmatpush1.msra.mxu0 0.0
    %455 = vmatprep.subr.mxu0 0.0
    %456 = vmatpush1.msra.mxu0 0.0
    %457 = vmatprep.subr.mxu0 0.0
    %458 = vmatpush1.msra.mxu0 0.0
    %459 = vmatprep.subr.mxu0 0.0
    %460 = vmatpush1.msra.mxu0 0.0
    %461 = vmatprep.subr.mxu0 0.0
    %462 = vmatpush1.msra.mxu0 0.0
    %463 = vmatprep.subr.mxu0 0.0
    %464 = vmatpush1.msra.mxu0 0.0
    %465 = vmatprep.subr.mxu0 0.0
    %466 = vmatpush1.msra.mxu0 0.0
    %467 = vmatprep.subr.mxu0 0.0
    %468 = vmatpush1.msra.mxu0 0.0
    %469 = vmatprep.subr.mxu0 0.0
    %470 = vmatpush1.msra.mxu0 0.0
    %471 = vmatprep.subr.mxu0 0.0
    %472 = vmatpush1.msra.mxu0 0.0
    %473 = vmatprep.subr.mxu0 0.0
    %474 = vmatpush1.msra.mxu0 0.0
    %475 = vmatprep.subr.mxu0 0.0
    %476 = vmatpush1.msra.mxu0 0.0
    %477 = vmatprep.subr.mxu0 0.0
    %478 = vmatpush1.msra.mxu0 0.0
    %479 = vmatprep.subr.mxu0 0.0
    %480 = vmatpush1.msra.mxu0 0.0
    %481 = vmatprep.subr.mxu0 0.0
    %482 = vmatpush1.msra.mxu0 0.0
    %483 = vmatprep.subr.mxu0 0.0
    %484 = vmatpush1.msra.mxu0 0.0
    %485 = vmatprep.subr.mxu0 0.0
    %486 = vmatpush1.msra.mxu0 0.0
    %487 = vmatprep.subr.mxu0 0.0
    %488 = vmatpush1.msra.mxu0 0.0
    %489 = vmatprep.subr.mxu0 0.0
    %490 = vmatpush1.msra.mxu0 0.0
    %491 = vmatprep.subr.mxu0 0.0
    %492 = vmatpush1.msra.mxu0 0.0
    %493 = vmatprep.subr.mxu0 0.0
    %494 = vmatpush1.msra.mxu0 0.0
    %495 = vmatprep.subr.mxu0 0.0
    %496 = vmatpush1.msra.mxu0 0.0
    %497 = vmatprep.subr.mxu0 0.0
    %498 = vmatpush1.msra.mxu0 0.0
    %499 = vmatprep.subr.mxu0 0.0
    %500 = vmatpush1.msra.mxu0 0.0
    %501 = vmatprep.subr.mxu0 0.0
    %502 = vmatpush1.msra.mxu0 0.0
    %503 = vmatprep.subr.mxu0 0.0
    %504 = vmatpush1.msra.mxu0 0.0
    %505 = vmatprep.subr.mxu0 0.0
    %506 = vmatpush1.msra.mxu0 0.0
    %507 = vmatprep.subr.mxu0 0.0
    %508 = vmatpush1.msra.mxu0 0.0
    %509 = vmatprep.subr.mxu0 0.0
    %510 = vmatpush1.msra.mxu0 0.0
    %511 = vmatprep.mubr.f32.mxu0 0.0
    %512 = vmatmul.mubr.f32.gmra.mrb[0].mxu0 %v445
    %v513 = vpop.f32.mrb[0].mxu0
    %v514 = vadd.f32 %v440, %v513
    %v515 = vpop.f32.mrb[0].mxu0
    %v516 = vadd.f32 %v442, %v515
    %517 = vdwg.mxu0
    %s518 = scalar_lea.vmem %s5, 16
    %v519 = vld [vmem:[%s518] sm:$0xff]
    %v521 = vsel %vm369, %v519, 0
    %523 = vmatprep.subr.mxu0 %v361
    %524 = vmatpush1.msra.mxu0 %v360
    %525 = vmatprep.subr.mxu0 %v363
    %526 = vmatpush1.msra.mxu0 %v362
    %527 = vmatprep.subr.mxu0 %v365
    %528 = vmatpush1.msra.mxu0 %v364
    %529 = vmatprep.subr.mxu0 0.0
    %530 = vmatpush1.msra.mxu0 0.0
    %531 = vmatprep.subr.mxu0 0.0
    %532 = vmatpush1.msra.mxu0 0.0
    %533 = vmatprep.subr.mxu0 0.0
    %534 = vmatpush1.msra.mxu0 0.0
    %535 = vmatprep.subr.mxu0 0.0
    %536 = vmatpush1.msra.mxu0 0.0
    %537 = vmatprep.subr.mxu0 0.0
    %538 = vmatpush1.msra.mxu0 0.0
    %539 = vmatprep.subr.mxu0 0.0
    %540 = vmatpush1.msra.mxu0 0.0
    %541 = vmatprep.subr.mxu0 0.0
    %542 = vmatpush1.msra.mxu0 0.0
    %543 = vmatprep.subr.mxu0 0.0
    %544 = vmatpush1.msra.mxu0 0.0
    %545 = vmatprep.subr.mxu0 0.0
    %546 = vmatpush1.msra.mxu0 0.0
    %547 = vmatprep.subr.mxu0 0.0
    %548 = vmatpush1.msra.mxu0 0.0
    %549 = vmatprep.subr.mxu0 0.0
    %550 = vmatpush1.msra.mxu0 0.0
    %551 = vmatprep.subr.mxu0 0.0
    %552 = vmatpush1.msra.mxu0 0.0
    %553 = vmatprep.subr.mxu0 0.0
    %554 = vmatpush1.msra.mxu0 0.0
    %555 = vmatprep.subr.mxu0 0.0
    %556 = vmatpush1.msra.mxu0 0.0
    %557 = vmatprep.subr.mxu0 0.0
    %558 = vmatpush1.msra.mxu0 0.0
    %559 = vmatprep.subr.mxu0 0.0
    %560 = vmatpush1.msra.mxu0 0.0
    %561 = vmatprep.subr.mxu0 0.0
    %562 = vmatpush1.msra.mxu0 0.0
    %563 = vmatprep.subr.mxu0 0.0
    %564 = vmatpush1.msra.mxu0 0.0
    %565 = vmatprep.subr.mxu0 0.0
    %566 = vmatpush1.msra.mxu0 0.0
    %567 = vmatprep.subr.mxu0 0.0
    %568 = vmatpush1.msra.mxu0 0.0
    %569 = vmatprep.subr.mxu0 0.0
    %570 = vmatpush1.msra.mxu0 0.0
    %571 = vmatprep.subr.mxu0 0.0
    %572 = vmatpush1.msra.mxu0 0.0
    %573 = vmatprep.subr.mxu0 0.0
    %574 = vmatpush1.msra.mxu0 0.0
    %575 = vmatprep.subr.mxu0 0.0
    %576 = vmatpush1.msra.mxu0 0.0
    %577 = vmatprep.subr.mxu0 0.0
    %578 = vmatpush1.msra.mxu0 0.0
    %579 = vmatprep.subr.mxu0 0.0
    %580 = vmatpush1.msra.mxu0 0.0
    %581 = vmatprep.subr.mxu0 0.0
    %582 = vmatpush1.msra.mxu0 0.0
    %583 = vmatprep.subr.mxu0 0.0
    %584 = vmatpush1.msra.mxu0 0.0
    %585 = vmatprep.subr.mxu0 0.0
    %586 = vmatpush1.msra.mxu0 0.0
    %587 = vmatprep.mubr.f32.mxu0 0.0
    %588 = vmatmul.mubr.f32.gmra.mrb[0].mxu0 %v521
    %v589 = vpop.f32.mrb[0].mxu0
    %v590 = vadd.f32 0.0, %v589
    %v591 = vpop.f32.mrb[0].mxu0
    %v592 = vadd.f32 0.0, %v591
    %593 = vdwg.mxu0
    %v594 = vadd.f32 %v514, %v590
    %v595 = vadd.f32 %v516, %v592
    %597 = vset.pattern.permute.xlu0 0
    %598 = vperm.xlu0 %597, %v81
    %v599 = vpop.permute.xlu0 %598
    %v601 = vadd.f32 %v594, %v599
    %v602 = vadd.f32 %v595, %v599
    %v603 = vxor.u32 %v601, 2147483648
    %v604 = vxor.u32 %v602, 2147483648
    %v605 = vmul.f32 %v603, 1.442695
    %v606 = vpow.pop %v605
    %v607 = vmul.f32 %v604, 1.442695
    %v608 = vpow.pop %v607
    %v609 = vadd.f32 %v606, 1.0
    %v610 = vadd.f32 %v608, 1.0
    %v611 = vrcp.pop %v609
    %v612 = vmul.f32 1.0, %v611
    %v613 = vrcp.pop %v610
    %v614 = vmul.f32 1.0, %v613
    %v615 = vsub.f32 %v88, %v86
    %v616 = vsub.f32 %v89, %v87
    %v617 = vmul.f32 %v612, %v615
    %v618 = vmul.f32 %v614, %v616
    %v619 = vadd.f32 %v86, %v617
    %v620 = vadd.f32 %v87, %v618
    %621 = vst [vmem:[#allocation8] sm:$0xff] %v619
    %622 = vst [vmem:[#allocation8 + $0x8] sm:$0xff] %v620
    %s623 = scalar_lea.vmem [#allocation2], 16
    %v624 = vld [vmem:[%s623] sm:$0xff]
    %v625 = vld [vmem:[%s623 + $0x8] sm:$0xff]
    %s626 = scalar_lea.vmem [#allocation5], 16
    %v627 = vld [vmem:[%s626] sm:$0xff]
    %v628 = vld [vmem:[%s626 + $0x8] sm:$0xff]
    %629 = vmatprep.subr.mxu0 %v628
    %630 = vmatpush1.msra.mxu0 %v627
    %631 = vmatprep.subr.mxu0 0.0
    %632 = vmatpush1.msra.mxu0 0.0
    %633 = vmatprep.subr.mxu0 0.0
    %634 = vmatpush1.msra.mxu0 0.0
    %635 = vmatprep.subr.mxu0 0.0
    %636 = vmatpush1.msra.mxu0 0.0
    %637 = vmatprep.subr.mxu0 0.0
    %638 = vmatpush1.msra.mxu0 0.0
    %639 = vmatprep.subr.mxu0 0.0
    %640 = vmatpush1.msra.mxu0 0.0
    %641 = vmatprep.subr.mxu0 0.0
    %642 = vmatpush1.msra.mxu0 0.0
    %643 = vmatprep.subr.mxu0 0.0
    %644 = vmatpush1.msra.mxu0 0.0
    %645 = vmatprep.subr.mxu0 0.0
    %646 = vmatpush1.msra.mxu0 0.0
    %647 = vmatprep.subr.mxu0 0.0
    %648 = vmatpush1.msra.mxu0 0.0
    %649 = vmatprep.subr.mxu0 0.0
    %650 = vmatpush1.msra.mxu0 0.0
    %651 = vmatprep.subr.mxu0 0.0
    %652 = vmatpush1.msra.mxu0 0.0
    %653 = vmatprep.subr.mxu0 0.0
    %654 = vmatpush1.msra.mxu0 0.0
    %655 = vmatprep.subr.mxu0 0.0
    %656 = vmatpush1.msra.mxu0 0.0
    %657 = vmatprep.subr.mxu0 0.0
    %658 = vmatpush1.msra.mxu0 0.0
    %659 = vmatprep.subr.mxu0 0.0
    %660 = vmatpush1.msra.mxu0 0.0
    %661 = vmatprep.subr.mxu0 0.0
    %662 = vmatpush1.msra.mxu0 0.0
    %663 = vmatprep.subr.mxu0 0.0
    %664 = vmatpush1.msra.mxu0 0.0
    %665 = vmatprep.subr.mxu0 0.0
    %666 = vmatpush1.msra.mxu0 0.0
    %667 = vmatprep.subr.mxu0 0.0
    %668 = vmatpush1.msra.mxu0 0.0
    %669 = vmatprep.subr.mxu0 0.0
    %670 = vmatpush1.msra.mxu0 0.0
    %671 = vmatprep.subr.mxu0 0.0
    %672 = vmatpush1.msra.mxu0 0.0
    %673 = vmatprep.subr.mxu0 0.0
    %674 = vmatpush1.msra.mxu0 0.0
    %675 = vmatprep.subr.mxu0 0.0
    %676 = vmatpush1.msra.mxu0 0.0
    %677 = vmatprep.subr.mxu0 0.0
    %678 = vmatpush1.msra.mxu0 0.0
    %679 = vmatprep.subr.mxu0 0.0
    %680 = vmatpush1.msra.mxu0 0.0
    %681 = vmatprep.subr.mxu0 0.0
    %682 = vmatpush1.msra.mxu0 0.0
    %683 = vmatprep.subr.mxu0 0.0
    %684 = vmatpush1.msra.mxu0 0.0
    %685 = vmatprep.subr.mxu0 0.0
    %686 = vmatpush1.msra.mxu0 0.0
    %687 = vmatprep.subr.mxu0 0.0
    %688 = vmatpush1.msra.mxu0 0.0
    %689 = vmatprep.subr.mxu0 0.0
    %690 = vmatpush1.msra.mxu0 0.0
    %691 = vmatprep.subr.mxu0 0.0
    %692 = vmatpush1.msra.mxu0 0.0
    %693 = vmatprep.mubr.f32.mxu0 0.0
    %694 = vmatmul.mubr.f32.gmra.mrb[0].mxu0 %v92
    %v695 = vpop.f32.mrb[0].mxu0
    %v696 = vadd.f32 0.0, %v695
    %v697 = vpop.f32.mrb[0].mxu0
    %v698 = vadd.f32 0.0, %v697
    %699 = vdwg.mxu0
    %700 = vmatprep.subr.mxu0 %v625
    %701 = vmatpush1.msra.mxu0 %v624
    %702 = vmatprep.subr.mxu0 0.0
    %703 = vmatpush1.msra.mxu0 0.0
    %704 = vmatprep.subr.mxu0 0.0
    %705 = vmatpush1.msra.mxu0 0.0
    %706 = vmatprep.subr.mxu0 0.0
    %707 = vmatpush1.msra.mxu0 0.0
    %708 = vmatprep.subr.mxu0 0.0
    %709 = vmatpush1.msra.mxu0 0.0
    %710 = vmatprep.subr.mxu0 0.0
    %711 = vmatpush1.msra.mxu0 0.0
    %712 = vmatprep.subr.mxu0 0.0
    %713 = vmatpush1.msra.mxu0 0.0
    %714 = vmatprep.subr.mxu0 0.0
    %715 = vmatpush1.msra.mxu0 0.0
    %716 = vmatprep.subr.mxu0 0.0
    %717 = vmatpush1.msra.mxu0 0.0
    %718 = vmatprep.subr.mxu0 0.0
    %719 = vmatpush1.msra.mxu0 0.0
    %720 = vmatprep.subr.mxu0 0.0
    %721 = vmatpush1.msra.mxu0 0.0
    %722 = vmatprep.subr.mxu0 0.0
    %723 = vmatpush1.msra.mxu0 0.0
    %724 = vmatprep.subr.mxu0 0.0
    %725 = vmatpush1.msra.mxu0 0.0
    %726 = vmatprep.subr.mxu0 0.0
    %727 = vmatpush1.msra.mxu0 0.0
    %728 = vmatprep.subr.mxu0 0.0
    %729 = vmatpush1.msra.mxu0 0.0
    %730 = vmatprep.subr.mxu0 0.0
    %731 = vmatpush1.msra.mxu0 0.0
    %732 = vmatprep.subr.mxu0 0.0
    %733 = vmatpush1.msra.mxu0 0.0
    %734 = vmatprep.subr.mxu0 0.0
    %735 = vmatpush1.msra.mxu0 0.0
    %736 = vmatprep.subr.mxu0 0.0
    %737 = vmatpush1.msra.mxu0 0.0
    %738 = vmatprep.subr.mxu0 0.0
    %739 = vmatpush1.msra.mxu0 0.0
    %740 = vmatprep.subr.mxu0 0.0
    %741 = vmatpush1.msra.mxu0 0.0
    %742 = vmatprep.subr.mxu0 0.0
    %743 = vmatpush1.msra.mxu0 0.0
    %744 = vmatprep.subr.mxu0 0.0
    %745 = vmatpush1.msra.mxu0 0.0
    %746 = vmatprep.subr.mxu0 0.0
    %747 = vmatpush1.msra.mxu0 0.0
    %748 = vmatprep.subr.mxu0 0.0
    %749 = vmatpush1.msra.mxu0 0.0
    %750 = vmatprep.subr.mxu0 0.0
    %751 = vmatpush1.msra.mxu0 0.0
    %752 = vmatprep.subr.mxu0 0.0
    %753 = vmatpush1.msra.mxu0 0.0
    %754 = vmatprep.subr.mxu0 0.0
    %755 = vmatpush1.msra.mxu0 0.0
    %756 = vmatprep.subr.mxu0 0.0
    %757 = vmatpush1.msra.mxu0 0.0
    %758 = vmatprep.subr.mxu0 0.0
    %759 = vmatpush1.msra.mxu0 0.0
    %760 = vmatprep.subr.mxu0 0.0
    %761 = vmatpush1.msra.mxu0 0.0
    %762 = vmatprep.subr.mxu0 0.0
    %763 = vmatpush1.msra.mxu0 0.0
    %764 = vmatprep.mubr.f32.mxu0 0.0
    %765 = vmatmul.mubr.f32.gmra.mrb[0].mxu0 %v166
    %v766 = vpop.f32.mrb[0].mxu0
    %v767 = vadd.f32 %v696, %v766
    %v768 = vpop.f32.mrb[0].mxu0
    %v769 = vadd.f32 %v698, %v768
    %770 = vdwg.mxu0
    %v771 = vadd.f32 %v767, %v242
    %v772 = vadd.f32 %v769, %v242
    %vm773 = vcmp.gt.f32.partialorder %v771, 0.0
    %vm774 = vcmp.gt.f32.partialorder %v772, 0.0
    %v775 = vmul.f32 %v771, 0.01
    %v776 = vmul.f32 %v772, 0.01
    %v777 = vsel %vm773, %v771, %v775
    %v778 = vsel %vm774, %v772, %v776
    %779 = vrot.lane.b32.xlu0 %v777, 16
    %v780 = vpop.permute.xlu0 %779
    %781 = vrot.lane.b32.xlu0 %v778, 16
    %v782 = vpop.permute.xlu0 %781
    %v783 = vsel %vm258, %v780, %v782
    %v784 = vsel %vm258, %v782, %v780
    %v785 = vmul.f32 %v784, %v265
    %v786 = vmul.f32 %v783, %v269
    %787 = vrot.lane.b32.xlu0 %v777, 112
    %v788 = vpop.permute.xlu0 %787
    %789 = vrot.lane.b32.xlu0 %v778, 112
    %v790 = vpop.permute.xlu0 %789
    %v791 = vsel %vm278, %v788, %v790
    %v792 = vsel %vm278, %v790, %v788
    %v793 = vmul.f32 %v791, %v285
    %v794 = vmul.f32 %v792, %v289
    %795 = vrot.lane.b32.xlu0 %v785, 1
    %v796 = vpop.permute.xlu0 %795
    %797 = vrot.lane.b32.xlu0 %v777, 1
    %v798 = vpop.permute.xlu0 %797
    %799 = vrot.lane.b32.xlu0 %v793, 1
    %v800 = vpop.permute.xlu0 %799
    %801 = vrot.lane.b32.xlu0 %v786, 1
    %v802 = vpop.permute.xlu0 %801
    %803 = vrot.lane.b32.xlu0 %v778, 1
    %v804 = vpop.permute.xlu0 %803
    %805 = vrot.lane.b32.xlu0 %v794, 1
    %v806 = vpop.permute.xlu0 %805
    %v807 = vsel %vm306, %v796, %v802
    %v808 = vsel %vm306, %v798, %v804
    %v809 = vsel %vm306, %v800, %v806
    %v810 = vsel %vm306, %v802, %v796
    %v811 = vsel %vm306, %v804, %v798
    %v812 = vsel %vm306, %v806, %v800
    %v813 = vmul.f32 %v810, %v317
    %v814 = vmul.f32 %v807, %v321
    %v815 = vmul.f32 %v811, %v317
    %v816 = vmul.f32 %v808, %v321
    %v817 = vmul.f32 %v812, %v317
    %v818 = vmul.f32 %v809, %v321
    %819 = vrot.lane.b32.xlu0 %v785, 127
    %v820 = vpop.permute.xlu0 %819
    %821 = vrot.lane.b32.xlu0 %v777, 127
    %v822 = vpop.permute.xlu0 %821
    %823 = vrot.lane.b32.xlu0 %v793, 127
    %v824 = vpop.permute.xlu0 %823
    %825 = vrot.lane.b32.xlu0 %v786, 127
    %v826 = vpop.permute.xlu0 %825
    %827 = vrot.lane.b32.xlu0 %v778, 127
    %v828 = vpop.permute.xlu0 %827
    %829 = vrot.lane.b32.xlu0 %v794, 127
    %v830 = vpop.permute.xlu0 %829
    %v831 = vsel %vm342, %v820, %v826
    %v832 = vsel %vm342, %v822, %v828
    %v833 = vsel %vm342, %v824, %v830
    %v834 = vsel %vm342, %v826, %v820
    %v835 = vsel %vm342, %v828, %v822
    %v836 = vsel %vm342, %v830, %v824
    %v837 = vmul.f32 %v831, %v353
    %v838 = vmul.f32 %v834, %v357
    %v839 = vmul.f32 %v832, %v353
    %v840 = vmul.f32 %v835, %v357
    %v841 = vmul.f32 %v833, %v353
    %v842 = vmul.f32 %v836, %v357
    %v843 = vld [vmem:[%s5] sm:$0xff]
    %v844 = vld [vmem:[%s367] sm:$0xff]
    %v846 = vsel %vm369, %v844, 0
    %848 = vmatprep.subr.mxu0 %v786
    %849 = vmatpush1.msra.mxu0 %v785
    %850 = vmatprep.subr.mxu0 %v778
    %851 = vmatpush1.msra.mxu0 %v777
    %852 = vmatprep.subr.mxu0 %v794
    %853 = vmatpush1.msra.mxu0 %v793
    %854 = vmatprep.subr.mxu0 0.0
    %855 = vmatpush1.msra.mxu0 0.0
    %856 = vmatprep.subr.mxu0 0.0
    %857 = vmatpush1.msra.mxu0 0.0
    %858 = vmatprep.subr.mxu0 0.0
    %859 = vmatpush1.msra.mxu0 0.0
    %860 = vmatprep.subr.mxu0 0.0
    %861 = vmatpush1.msra.mxu0 0.0
    %862 = vmatprep.subr.mxu0 0.0
    %863 = vmatpush1.msra.mxu0 0.0
    %864 = vmatprep.subr.mxu0 0.0
    %865 = vmatpush1.msra.mxu0 0.0
    %866 = vmatprep.subr.mxu0 0.0
    %867 = vmatpush1.msra.mxu0 0.0
    %868 = vmatprep.subr.mxu0 0.0
    %869 = vmatpush1.msra.mxu0 0.0
    %870 = vmatprep.subr.mxu0 0.0
    %871 = vmatpush1.msra.mxu0 0.0
    %872 = vmatprep.subr.mxu0 0.0
    %873 = vmatpush1.msra.mxu0 0.0
    %874 = vmatprep.subr.mxu0 0.0
    %875 = vmatpush1.msra.mxu0 0.0
    %876 = vmatprep.subr.mxu0 0.0
    %877 = vmatpush1.msra.mxu0 0.0
    %878 = vmatprep.subr.mxu0 0.0
    %879 = vmatpush1.msra.mxu0 0.0
    %880 = vmatprep.subr.mxu0 0.0
    %881 = vmatpush1.msra.mxu0 0.0
    %882 = vmatprep.subr.mxu0 0.0
    %883 = vmatpush1.msra.mxu0 0.0
    %884 = vmatprep.subr.mxu0 0.0
    %885 = vmatpush1.msra.mxu0 0.0
    %886 = vmatprep.subr.mxu0 0.0
    %887 = vmatpush1.msra.mxu0 0.0
    %888 = vmatprep.subr.mxu0 0.0
    %889 = vmatpush1.msra.mxu0 0.0
    %890 = vmatprep.subr.mxu0 0.0
    %891 = vmatpush1.msra.mxu0 0.0
    %892 = vmatprep.subr.mxu0 0.0
    %893 = vmatpush1.msra.mxu0 0.0
    %894 = vmatprep.subr.mxu0 0.0
    %895 = vmatpush1.msra.mxu0 0.0
    %896 = vmatprep.subr.mxu0 0.0
    %897 = vmatpush1.msra.mxu0 0.0
    %898 = vmatprep.subr.mxu0 0.0
    %899 = vmatpush1.msra.mxu0 0.0
    %900 = vmatprep.subr.mxu0 0.0
    %901 = vmatpush1.msra.mxu0 0.0
    %902 = vmatprep.subr.mxu0 0.0
    %903 = vmatpush1.msra.mxu0 0.0
    %904 = vmatprep.subr.mxu0 0.0
    %905 = vmatpush1.msra.mxu0 0.0
    %906 = vmatprep.subr.mxu0 0.0
    %907 = vmatpush1.msra.mxu0 0.0
    %908 = vmatprep.subr.mxu0 0.0
    %909 = vmatpush1.msra.mxu0 0.0
    %910 = vmatprep.subr.mxu0 0.0
    %911 = vmatpush1.msra.mxu0 0.0
    %912 = vmatprep.mubr.f32.mxu0 0.0
    %913 = vmatmul.mubr.f32.gmra.mrb[0].mxu0 %v846
    %v914 = vpop.f32.mrb[0].mxu0
    %v915 = vadd.f32 0.0, %v914
    %v916 = vpop.f32.mrb[0].mxu0
    %v917 = vadd.f32 0.0, %v916
    %918 = vdwg.mxu0
    %v920 = vsel %vm369, %v843, 0
    %922 = vmatprep.subr.mxu0 %v814
    %923 = vmatpush1.msra.mxu0 %v813
    %924 = vmatprep.subr.mxu0 %v816
    %925 = vmatpush1.msra.mxu0 %v815
    %926 = vmatprep.subr.mxu0 %v818
    %927 = vmatpush1.msra.mxu0 %v817
    %928 = vmatprep.subr.mxu0 0.0
    %929 = vmatpush1.msra.mxu0 0.0
    %930 = vmatprep.subr.mxu0 0.0
    %931 = vmatpush1.msra.mxu0 0.0
    %932 = vmatprep.subr.mxu0 0.0
    %933 = vmatpush1.msra.mxu0 0.0
    %934 = vmatprep.subr.mxu0 0.0
    %935 = vmatpush1.msra.mxu0 0.0
    %936 = vmatprep.subr.mxu0 0.0
    %937 = vmatpush1.msra.mxu0 0.0
    %938 = vmatprep.subr.mxu0 0.0
    %939 = vmatpush1.msra.mxu0 0.0
    %940 = vmatprep.subr.mxu0 0.0
    %941 = vmatpush1.msra.mxu0 0.0
    %942 = vmatprep.subr.mxu0 0.0
    %943 = vmatpush1.msra.mxu0 0.0
    %944 = vmatprep.subr.mxu0 0.0
    %945 = vmatpush1.msra.mxu0 0.0
    %946 = vmatprep.subr.mxu0 0.0
    %947 = vmatpush1.msra.mxu0 0.0
    %948 = vmatprep.subr.mxu0 0.0
    %949 = vmatpush1.msra.mxu0 0.0
    %950 = vmatprep.subr.mxu0 0.0
    %951 = vmatpush1.msra.mxu0 0.0
    %952 = vmatprep.subr.mxu0 0.0
    %953 = vmatpush1.msra.mxu0 0.0
    %954 = vmatprep.subr.mxu0 0.0
    %955 = vmatpush1.msra.mxu0 0.0
    %956 = vmatprep.subr.mxu0 0.0
    %957 = vmatpush1.msra.mxu0 0.0
    %958 = vmatprep.subr.mxu0 0.0
    %959 = vmatpush1.msra.mxu0 0.0
    %960 = vmatprep.subr.mxu0 0.0
    %961 = vmatpush1.msra.mxu0 0.0
    %962 = vmatprep.subr.mxu0 0.0
    %963 = vmatpush1.msra.mxu0 0.0
    %964 = vmatprep.subr.mxu0 0.0
    %965 = vmatpush1.msra.mxu0 0.0
    %966 = vmatprep.subr.mxu0 0.0
    %967 = vmatpush1.msra.mxu0 0.0
    %968 = vmatprep.subr.mxu0 0.0
    %969 = vmatpush1.msra.mxu0 0.0
    %970 = vmatprep.subr.mxu0 0.0
    %971 = vmatpush1.msra.mxu0 0.0
    %972 = vmatprep.subr.mxu0 0.0
    %973 = vmatpush1.msra.mxu0 0.0
    %974 = vmatprep.subr.mxu0 0.0
    %975 = vmatpush1.msra.mxu0 0.0
    %976 = vmatprep.subr.mxu0 0.0
    %977 = vmatpush1.msra.mxu0 0.0
    %978 = vmatprep.subr.mxu0 0.0
    %979 = vmatpush1.msra.mxu0 0.0
    %980 = vmatprep.subr.mxu0 0.0
    %981 = vmatpush1.msra.mxu0 0.0
    %982 = vmatprep.subr.mxu0 0.0
    %983 = vmatpush1.msra.mxu0 0.0
    %984 = vmatprep.subr.mxu0 0.0
    %985 = vmatpush1.msra.mxu0 0.0
    %986 = vmatprep.mubr.f32.mxu0 0.0
    %987 = vmatmul.mubr.f32.gmra.mrb[0].mxu0 %v920
    %v988 = vpop.f32.mrb[0].mxu0
    %v989 = vadd.f32 %v915, %v988
    %v990 = vpop.f32.mrb[0].mxu0
    %v991 = vadd.f32 %v917, %v990
    %992 = vdwg.mxu0
    %v993 = vld [vmem:[%s518] sm:$0xff]
    %v995 = vsel %vm369, %v993, 0
    %997 = vmatprep.subr.mxu0 %v838
    %998 = vmatpush1.msra.mxu0 %v837
    %999 = vmatprep.subr.mxu0 %v840
    %1000 = vmatpush1.msra.mxu0 %v839
    %1001 = vmatprep.subr.mxu0 %v842
    %1002 = vmatpush1.msra.mxu0 %v841
    %1003 = vmatprep.subr.mxu0 0.0
    %1004 = vmatpush1.msra.mxu0 0.0
    %1005 = vmatprep.subr.mxu0 0.0
    %1006 = vmatpush1.msra.mxu0 0.0
    %1007 = vmatprep.subr.mxu0 0.0
    %1008 = vmatpush1.msra.mxu0 0.0
    %1009 = vmatprep.subr.mxu0 0.0
    %1010 = vmatpush1.msra.mxu0 0.0
    %1011 = vmatprep.subr.mxu0 0.0
    %1012 = vmatpush1.msra.mxu0 0.0
    %1013 = vmatprep.subr.mxu0 0.0
    %1014 = vmatpush1.msra.mxu0 0.0
    %1015 = vmatprep.subr.mxu0 0.0
    %1016 = vmatpush1.msra.mxu0 0.0
    %1017 = vmatprep.subr.mxu0 0.0
    %1018 = vmatpush1.msra.mxu0 0.0
    %1019 = vmatprep.subr.mxu0 0.0
    %1020 = vmatpush1.msra.mxu0 0.0
    %1021 = vmatprep.subr.mxu0 0.0
    %1022 = vmatpush1.msra.mxu0 0.0
    %1023 = vmatprep.subr.mxu0 0.0
    %1024 = vmatpush1.msra.mxu0 0.0
    %1025 = vmatprep.subr.mxu0 0.0
    %1026 = vmatpush1.msra.mxu0 0.0
    %1027 = vmatprep.subr.mxu0 0.0
    %1028 = vmatpush1.msra.mxu0 0.0
    %1029 = vmatprep.subr.mxu0 0.0
    %1030 = vmatpush1.msra.mxu0 0.0
    %1031 = vmatprep.subr.mxu0 0.0
    %1032 = vmatpush1.msra.mxu0 0.0
    %1033 = vmatprep.subr.mxu0 0.0
    %1034 = vmatpush1.msra.mxu0 0.0
    %1035 = vmatprep.subr.mxu0 0.0
    %1036 = vmatpush1.msra.mxu0 0.0
    %1037 = vmatprep.subr.mxu0 0.0
    %1038 = vmatpush1.msra.mxu0 0.0
    %1039 = vmatprep.subr.mxu0 0.0
    %1040 = vmatpush1.msra.mxu0 0.0
    %1041 = vmatprep.subr.mxu0 0.0
    %1042 = vmatpush1.msra.mxu0 0.0
    %1043 = vmatprep.subr.mxu0 0.0
    %1044 = vmatpush1.msra.mxu0 0.0
    %1045 = vmatprep.subr.mxu0 0.0
    %1046 = vmatpush1.msra.mxu0 0.0
    %1047 = vmatprep.subr.mxu0 0.0
    %1048 = vmatpush1.msra.mxu0 0.0
    %1049 = vmatprep.subr.mxu0 0.0
    %1050 = vmatpush1.msra.mxu0 0.0
    %1051 = vmatprep.subr.mxu0 0.0
    %1052 = vmatpush1.msra.mxu0 0.0
    %1053 = vmatprep.subr.mxu0 0.0
    %1054 = vmatpush1.msra.mxu0 0.0
    %1055 = vmatprep.subr.mxu0 0.0
    %1056 = vmatpush1.msra.mxu0 0.0
    %1057 = vmatprep.subr.mxu0 0.0
    %1058 = vmatpush1.msra.mxu0 0.0
    %1059 = vmatprep.subr.mxu0 0.0
    %1060 = vmatpush1.msra.mxu0 0.0
    %1061 = vmatprep.mubr.f32.mxu0 0.0
    %1062 = vmatmul.mubr.f32.gmra.mrb[0].mxu0 %v995
    %v1063 = vpop.f32.mrb[0].mxu0
    %v1064 = vadd.f32 0.0, %v1063
    %v1065 = vpop.f32.mrb[0].mxu0
    %v1066 = vadd.f32 0.0, %v1065
    %1067 = vdwg.mxu0
    %v1068 = vadd.f32 %v989, %v1064
    %v1069 = vadd.f32 %v991, %v1066
    %v1070 = vadd.f32 %v1068, %v599
    %v1071 = vadd.f32 %v1069, %v599
    %v1072 = vxor.u32 %v1070, 2147483648
    %v1073 = vxor.u32 %v1071, 2147483648
    %v1074 = vmul.f32 %v1072, 1.442695
    %v1075 = vpow.pop %v1074
    %v1076 = vmul.f32 %v1073, 1.442695
    %v1077 = vpow.pop %v1076
    %v1078 = vadd.f32 %v1075, 1.0
    %v1079 = vadd.f32 %v1077, 1.0
    %v1080 = vrcp.pop %v1078
    %v1081 = vmul.f32 1.0, %v1080
    %v1082 = vrcp.pop %v1079
    %v1083 = vmul.f32 1.0, %v1082
    %v1084 = vsub.f32 %v627, %v624
    %v1085 = vsub.f32 %v628, %v625
    %v1086 = vmul.f32 %v1081, %v1084
    %v1087 = vmul.f32 %v1083, %v1085
    %v1088 = vadd.f32 %v624, %v1086
    %v1089 = vadd.f32 %v625, %v1087
    %s1090 = scalar_lea.vmem [#allocation8], 16
    %1091 = vst [vmem:[%s1090] sm:$0xff] %v1088
    %1092 = vst [vmem:[%s1090 + $0x8] sm:$0xff] %v1089
    // Predicated region
    $region58: #{tpu_custom_call.1} parent=1 // pred_check
      _
    $region59: #{tpu_custom_call.1} parent=1 // pred_check_branch
      %1094 = sbr.rel (0) target = $region61
    $region60: #{tpu_custom_call.1} parent=1 // pred_region
      %s1096 = ssub.s32 512, 512
      %1097 = vsyncadd [#allocation4], %s1096
      %s1098 = sshll.u32 [#allocation8], 4
      %s1099 = int_to_ptr.vmem [resolvable:$true] %s1098
      %1104 = dma.vmem_to_hbm [thread:$0]  %s1099, 512, %s11, [#allocation4], 256, 256, 16
    $region61: #{tpu_custom_call.1} parent=1 // pred_fallthru
      _
    // Predicated region
    $region62: #{tpu_custom_call.1} parent=1 // pred_check
      _
    $region63: #{tpu_custom_call.1} parent=1 // pred_check_branch
      %1106 = sbr.rel (0) target = $region65
    $region64: #{tpu_custom_call.1} parent=1 // pred_region
      %1107 = dma.done [#allocation4], 512
    $region65: #{tpu_custom_call.1} parent=1 // pred_fallthru
      _
    %1108 = vsyncpa [#allocation3], 1
    %1109 = vsyncpa [#allocation6], 1
    %1110 = vsyncpa [#allocation4], 1

</llo_original>
